<compile_context>
chip_gen: v7x
topology: tpu7x:2x2x1
jax: 0.10.0
libtpu: 0.0.40
codegen_flags: <defaults>
</compile_context>

<pallas_src>
import jax
import jax.numpy as jnp
from jax.experimental import pallas as pl
from jax.experimental.pallas import tpu as pltpu


def _round_up(x: int, m: int) -> int:
    return ((x + m - 1) // m) * m


def _concat_kernel(a_ref, b_ref, out_ref):
    # a_ref : input rows [ i   *TM, (i+1)*TM )                shape (TM, D)
    # b_ref : input rows [(i+1)*TM, (i+2)*TM ) (clamped)       shape (TM, D)
    # out_ref: output rows [i*TM, (i+1)*TM),                   shape (TM, window*D)
    #
    # Output row r (local) = concat(input rows r .. r+window-1), all of which
    # lie inside the stitched (2*TM, D) halo buffer (window-1 <= TM).
    tm, d = a_ref.shape
    window = out_ref.shape[1] // d
    stitched = jnp.concatenate([a_ref[...], b_ref[...]], axis=0)  # (2*TM, D)
    for w in range(window):  # small static loop over the window offset
        out_ref[:, w * d:(w + 1) * d] = stitched[w:w + tm, :]


def concat_window(embeddings: jax.Array, window: int,
                  block_rows: int = 512) -> jax.Array:
    """Pallas equivalent of Concat(window).forward(embeddings)."""
    n, d = embeddings.shape
    m = n - window + 1
    assert m >= 1, "need at least `window` rows"

    # Row tile: multiple of 8 sublanes, large enough that the two-block halo
    # covers window-1 extra rows, and no larger than the (rounded) output.
    tm = min(_round_up(block_rows, 8), _round_up(m, 8))
    tm = max(tm, _round_up(max(window - 1, 1), 8))

    n_in_blocks = pl.cdiv(n, tm)   # input row-blocks available for the halo
    grid = (pl.cdiv(m, tm),)       # one grid step per output row tile

    return pl.pallas_call(
        _concat_kernel,
        out_shape=jax.ShapeDtypeStruct((m, window * d), embeddings.dtype),
        grid=grid,
        in_specs=[
            # Same array passed twice: tile i and its successor (clamped at
            # the end; the clamped duplicate only feeds out-of-bounds output
            # rows, whose writes Pallas drops).
            pl.BlockSpec((tm, d), lambda i: (i, 0)),
            pl.BlockSpec((tm, d),
                         lambda i: (jnp.minimum(i + 1, n_in_blocks - 1), 0)),
        ],
        # Lane-dense, HBM-contiguous output block: the whole window*D width.
        out_specs=pl.BlockSpec((tm, window * d), lambda i: (i, 0)),
        compiler_params=pltpu.CompilerParams(
            dimension_semantics=("parallel",),
        ),
    )(embeddings, embeddings)


if __name__ == "__main__":
    # Small deterministic example: N=16 timesteps, D=128 embedding dim, window=3.
    key = jax.random.PRNGKey(0)
    N, D, WINDOW = 16, 128, 3
    embeddings = jax.random.normal(key, (N, D), dtype=jnp.float32)

    # Pure-JAX reference of the PyTorch semantics.
    M = N - WINDOW + 1
    ref = jnp.stack(
        [embeddings[w: w + M] for w in range(WINDOW)], axis=1
    ).reshape(M, WINDOW * D)

    # 1) Default tile size (single tile covers the whole small output).
    out = jax.block_until_ready(concat_window(embeddings, WINDOW))
    assert out.shape == (M, WINDOW * D), out.shape
    assert out.dtype == embeddings.dtype
    assert jnp.allclose(out, ref), "mismatch vs reference (single tile)"

    # 2) Tiny tile size to exercise the multi-tile halo path and the clamped
    #    last tile with a partial output block (M=14, TM=8 -> 2 grid steps).
    out_tiled = jax.block_until_ready(
        concat_window(embeddings, WINDOW, block_rows=8))
    assert jnp.allclose(out_tiled, ref), "mismatch vs reference (multi tile)"

    print("KERNEL_OK")
</pallas_src>

<mosaic_0001>
module attributes {stable_mosaic.version = 11 : i64} {
  func.func @_concat_kernel(%arg0: i32, %arg1: memref<16x128xf32, #tpu.memory_space<vmem>>, %arg2: memref<16x128xf32, #tpu.memory_space<vmem>>, %arg3: memref<16x384xf32, #tpu.memory_space<vmem>>) attributes {dimension_semantics = [#tpu.dimension_semantics<parallel>], iteration_bounds = array<i64: 1>, scalar_prefetch = 0 : i64, scratch_operands = 0 : i64, tpu.core_type = #tpu.core_type<tc>, window_params = [{transform_indices = @transform_0, window_bounds = array<i64: 16, 128>}, {transform_indices = @transform_1, window_bounds = array<i64: 16, 128>}, {transform_indices = @transform_2, window_bounds = array<i64: 16, 384>}]} {
    %c0 = arith.constant 0 : index
    %c0_0 = arith.constant 0 : index
    %0 = vector.load %arg1[%c0, %c0_0] : memref<16x128xf32, #tpu.memory_space<vmem>>, vector<16x128xf32>
    %c0_1 = arith.constant 0 : index
    %c0_2 = arith.constant 0 : index
    %1 = vector.load %arg2[%c0_1, %c0_2] : memref<16x128xf32, #tpu.memory_space<vmem>>, vector<16x128xf32>
    %2 = tpu.concatenate %0, %1 in 0 : vector<16x128xf32>, vector<16x128xf32> -> vector<32x128xf32>
    %3 = vector.extract_strided_slice %2 {offsets = [0, 0], sizes = [16, 128], strides = [1, 1]} : vector<32x128xf32> to vector<16x128xf32>
    %c0_3 = arith.constant 0 : index
    %c0_4 = arith.constant 0 : index
    %4 = vector.load %arg3[%c0_3, %c0_4] : memref<16x384xf32, #tpu.memory_space<vmem>>, vector<16x128xf32>
    tpu.vector_store %arg3[%c0_3, %c0_4], %3 {strides = array<i32>} : memref<16x384xf32, #tpu.memory_space<vmem>>, vector<16x128xf32>,
    %5 = vector.extract_strided_slice %2 {offsets = [1, 0], sizes = [16, 128], strides = [1, 1]} : vector<32x128xf32> to vector<16x128xf32>
    %c0_5 = arith.constant 0 : index
    %c128 = arith.constant 128 : index
    %6 = vector.load %arg3[%c0_5, %c128] : memref<16x384xf32, #tpu.memory_space<vmem>>, vector<16x128xf32>
    tpu.vector_store %arg3[%c0_5, %c128], %5 {strides = array<i32>} : memref<16x384xf32, #tpu.memory_space<vmem>>, vector<16x128xf32>,
    %7 = vector.extract_strided_slice %2 {offsets = [2, 0], sizes = [16, 128], strides = [1, 1]} : vector<32x128xf32> to vector<16x128xf32>
    %c0_6 = arith.constant 0 : index
    %c256 = arith.constant 256 : index
    %8 = vector.load %arg3[%c0_6, %c256] : memref<16x384xf32, #tpu.memory_space<vmem>>, vector<16x128xf32>
    tpu.vector_store %arg3[%c0_6, %c256], %7 {strides = array<i32>} : memref<16x384xf32, #tpu.memory_space<vmem>>, vector<16x128xf32>,
    return
  }
  func.func @transform_0(%arg0: i32) -> (i32, i32) {
    %c0_i32 = arith.constant 0 : i32
    %c0_i32_0 = arith.constant 0 : i32
    return %arg0, %c0_i32 : i32, i32
  }
  func.func @transform_1(%arg0: i32) -> (i32, i32) {
    %c1_i32 = arith.constant 1 : i32
    %0 = arith.addi %arg0, %c1_i32 : i32
    %c0_i32 = arith.constant 0 : i32
    %1 = arith.minsi %0, %c0_i32 : i32
    %c0_i32_0 = arith.constant 0 : i32
    %c0_i32_1 = arith.constant 0 : i32
    return %1, %c0_i32_0 : i32, i32
  }
  func.func @transform_2(%arg0: i32) -> (i32, i32) {
    %c0_i32 = arith.constant 0 : i32
    %c0_i32_0 = arith.constant 0 : i32
    return %arg0, %c0_i32 : i32, i32
  }
}

</mosaic_0001>

<llo_original>
// kernel: tpu_custom_call.1
$region0: #{tpu_custom_call.1}
  #allocation0 [shape = 'u32[]', space=smem, size = 0x4, offset = 0x4, fixed_abs, tag = 'smem constant byte address 0x4 - core index']
  #allocation1 [shape = 'u32[144,128]{1,0:T(1,128)}', space=vmem, size = 0x12000, scoped, tag = 'internal scratch']
  %s0 = inlined_call_operand.hbm [shape: f32[16,128], index: 0, kind: input, shape index: {}]
  %s1 = inlined_call_operand.hbm [shape: f32[16,128], index: 1, kind: input, shape index: {}]
  %s2 = inlined_call_operand.hbm [shape: f32[14,384], index: 2, kind: output, shape index: {}]
  %s3 = sld [smem:[#allocation0]]
  $region26: #{tpu_custom_call.1} parent=0
    _
  %s5 = ssub.s32 1, %s3
  %s6 = scalar_select 0, %s5, %s3
  $region1: #{tpu_custom_call.1} parent=0
    #allocation2 [shape = 'u8[8192]{0}', space=vmem, size = 0x2000, scoped, tag = 'input window, operand 0, single buffered']
    #allocation3 [shape = 's32[1]{0}', space=sflag, size = 0x4, scoped, tag = 'scoped memory for tpu_custom_call.1']
    #allocation4 [shape = 's32[1]{0}', space=sflag, size = 0x4, scoped, tag = 'scoped memory for tpu_custom_call.1']
    #allocation5 [shape = 'u8[8192]{0}', space=vmem, size = 0x2000, scoped, tag = 'input window, operand 1, single buffered']
    #allocation6 [shape = 's32[1]{0}', space=sflag, size = 0x4, scoped, tag = 'scoped memory for tpu_custom_call.1']
    #allocation7 [shape = 'u8[24576]{0}', space=vmem, size = 0x6000, scoped, tag = 'output window, operand 0, single buffered']
    %7 = vsyncpa [#allocation3], 0
    %8 = vsyncpa [#allocation6], 0
    %9 = vsyncpa [#allocation4], 0
    // Predicated region
    $region2: #{tpu_custom_call.1} parent=1 // pred_check
      _
    $region3: #{tpu_custom_call.1} parent=1 // pred_check_branch
      %11 = sbr.rel (0) target = $region5
    $region4: #{tpu_custom_call.1} parent=1 // pred_region
      %s13 = ssub.s32 256, 256
      %14 = vsyncadd [#allocation3], %s13
      %s15 = sshll.u32 [#allocation2], 4
      %s16 = int_to_ptr.vmem [resolvable:$true] %s15
      %21 = dma.hbm_to_vmem [thread:$0]  %s0, 256, %s16, [#allocation3], 128, 128, 8
    $region5: #{tpu_custom_call.1} parent=1 // pred_fallthru
      _
    // Predicated region
    $region6: #{tpu_custom_call.1} parent=1 // pred_check
      _
    $region7: #{tpu_custom_call.1} parent=1 // pred_check_branch
      %23 = sbr.rel (0) target = $region9
    $region8: #{tpu_custom_call.1} parent=1 // pred_region
      %s24 = sadd.s32 0, 1
      %p25 = scmp.lt.s32.totalorder %s24, 0
      %s26 = scalar_select %p25, %s24, 0
      %s27 = smul.u32 2, %s26
      %s29 = ssub.s32 256, 256
      %30 = vsyncadd [#allocation6], %s29
      %s31 = smul.addr %s27, 128
      %s32 = scalar_lea.hbm %s1, %s31
      %s33 = sshll.u32 [#allocation5], 4
      %s34 = int_to_ptr.vmem [resolvable:$true] %s33
      %39 = dma.hbm_to_vmem [thread:$0]  %s32, 256, %s34, [#allocation6], 128, 128, 8
    $region9: #{tpu_custom_call.1} parent=1 // pred_fallthru
      _
    // Predicated region
    $region10: #{tpu_custom_call.1} parent=1 // pred_check
      _
    $region11: #{tpu_custom_call.1} parent=1 // pred_check_branch
      %41 = sbr.rel (0) target = $region13
    $region12: #{tpu_custom_call.1} parent=1 // pred_region
      %42 = dma.done [#allocation3], 256
    $region13: #{tpu_custom_call.1} parent=1 // pred_fallthru
      _
    // Predicated region
    $region14: #{tpu_custom_call.1} parent=1 // pred_check
      _
    $region15: #{tpu_custom_call.1} parent=1 // pred_check_branch
      %44 = sbr.rel (0) target = $region17
    $region16: #{tpu_custom_call.1} parent=1 // pred_region
      %45 = dma.done [#allocation6], 256
    $region17: #{tpu_custom_call.1} parent=1 // pred_fallthru
      _
    %s46 = sadd.s32 0, 1
    %p47 = scmp.lt.s32.totalorder %s46, 0
    %s48 = scalar_select %p47, %s46, 0
    %s49 = smul.u32 2, %s48
    %v50 = vld [vmem:[#allocation2] sm:$0xff]
    %v51 = vld [vmem:[#allocation2 + $0x8] sm:$0xff]
    %v52 = vld [vmem:[#allocation5] sm:$0xff]
    %53 = vst [vmem:[#allocation7] sm:$0xff] %v50
    %54 = vst [vmem:[#allocation7 + $0x18] sm:$0xff] %v51
    %vm58 = vcmask 1046528
    %v59 = vrot.slane %v50, 1
    %v60 = vrot.slane %v51, 1
    %v61 = vsel %vm58, %v59, %v60
    %v62 = vrot.slane %v52, 1
    %v63 = vsel %vm58, %v60, %v62
    %66 = vst [vmem:[#allocation7 + $0x8] sm:$0xff] %v61
    %67 = vst [vmem:[#allocation7 + $0x20] sm:$0xff] %v63
    %vm68 = vcmask 1045504
    %v69 = vrot.slane %v50, 2
    %v70 = vrot.slane %v51, 2
    %v71 = vsel %vm68, %v69, %v70
    %v72 = vrot.slane %v52, 2
    %v73 = vsel %vm68, %v70, %v72
    %76 = vst [vmem:[#allocation7 + $0x10] sm:$0xff] %v71
    %77 = vst [vmem:[#allocation7 + $0x28] sm:$0xff] %v73
    // Predicated region
    $region18: #{tpu_custom_call.1} parent=1 // pred_check
      _
    $region19: #{tpu_custom_call.1} parent=1 // pred_check_branch
      %79 = sbr.rel (0) target = $region21
    $region20: #{tpu_custom_call.1} parent=1 // pred_region
      %s81 = ssub.s32 768, 768
      %82 = vsyncadd [#allocation4], %s81
      %s83 = sshll.u32 [#allocation7], 4
      %s84 = int_to_ptr.vmem [resolvable:$true] %s83
      %89 = dma.vmem_to_hbm [thread:$0]  %s84, 768, %s2, [#allocation4], 384, 384, 24
    $region21: #{tpu_custom_call.1} parent=1 // pred_fallthru
      _
    // Predicated region
    $region22: #{tpu_custom_call.1} parent=1 // pred_check
      _
    $region23: #{tpu_custom_call.1} parent=1 // pred_check_branch
      %91 = sbr.rel (0) target = $region25
    $region24: #{tpu_custom_call.1} parent=1 // pred_region
      %92 = dma.done [#allocation4], 768
    $region25: #{tpu_custom_call.1} parent=1 // pred_fallthru
      _
    %93 = vsyncpa [#allocation3], 1
    %94 = vsyncpa [#allocation6], 1
    %95 = vsyncpa [#allocation4], 1

</llo_original>
